<compile_context>
chip_gen: v7x
topology: tpu7x:2x2x1
jax: 0.10.0
libtpu: 0.0.40
codegen_flags: <defaults>
</compile_context>

<pallas_src>
import functools
import math

import jax
import jax.numpy as jnp
from jax.experimental import pallas as pl
from jax.experimental.pallas import tpu as pltpu


_VMEM_SPEC = pl.BlockSpec(memory_space=pltpu.MemorySpace.VMEM)


# ------------------------------ fused kernel ------------------------------- #

def decoder_kernel(xh0_ref, h0_ref, c0_ref, *refs, num_layers, hidden):
    """Fused num_layers-deep single-step LSTM + Linear head.

    refs = (w_cat_0, b_0, ..., w_cat_{L-1}, b_{L-1}, w_lin, b_lin,
            out_ref, h_out_ref, c_out_ref)

    Gate order matches PyTorch: i, f, g, o.
    """
    H = hidden
    lstm_refs = refs[: 2 * num_layers]
    w_lin_ref = refs[2 * num_layers]
    b_lin_ref = refs[2 * num_layers + 1]
    out_ref, h_out_ref, c_out_ref = refs[2 * num_layers + 2:]

    layer_in = None  # (B, H) f32 carry, lives in vregs/VMEM across layers
    for l in range(num_layers):               # static unroll (num_layers small)
        w = lstm_refs[2 * l][...]             # (in_l + H, 4H), possibly bf16
        b = lstm_refs[2 * l + 1][...]         # (1, 4H) f32
        h_prev = h0_ref[l].astype(jnp.float32)
        c_prev = c0_ref[l].astype(jnp.float32)

        if l == 0:
            xh = xh0_ref[...].astype(jnp.float32)        # [x | h0[0]] prebuilt
        else:
            xh = jnp.concatenate([layer_in, h_prev], axis=-1)  # (B, 2H)

        # One MXU matmul per layer; f32 accumulation.
        gates = jnp.dot(xh.astype(w.dtype), w,
                        preferred_element_type=jnp.float32) + b   # (B, 4H)

        i = jax.nn.sigmoid(gates[:, 0 * H:1 * H])
        f = jax.nn.sigmoid(gates[:, 1 * H:2 * H])
        g = jnp.tanh(gates[:, 2 * H:3 * H])
        o = jax.nn.sigmoid(gates[:, 3 * H:4 * H])

        c_new = f * c_prev + i * g
        h_new = o * jnp.tanh(c_new)

        h_out_ref[l] = h_new.astype(h_out_ref.dtype)
        c_out_ref[l] = c_new.astype(c_out_ref.dtype)
        layer_in = h_new

    # Linear head on the last layer's hidden state.
    wl = w_lin_ref[...]
    y = jnp.dot(layer_in.astype(wl.dtype), wl,
                preferred_element_type=jnp.float32) + b_lin_ref[...]
    out_ref[...] = y.astype(out_ref.dtype)


# --------------------------------- wrapper ---------------------------------- #

def decoder_forward(x, encoder_hidden_states, params):
    """Pallas equivalent of Decoder.forward (eval mode).

    x: (B, output_size)
    encoder_hidden_states: (h0, c0), each (num_layers, B, d_model)
    returns (output (B, output_size), (h_n, c_n))
    """
    h0, c0 = encoder_hidden_states
    num_layers, B, H = h0.shape
    w_lin, b_lin = params["linear"]
    out_size = w_lin.shape[1]

    # Layer-0 [x | h0[0]] concat is layout plumbing done once in the wrapper,
    # so layer 0 is a single matmul inside the kernel as well.
    xh0 = jnp.concatenate([x, h0[0]], axis=-1)           # (B, output_size + H)

    lstm_args = []
    for w_cat, b in params["lstm"]:
        lstm_args += [w_cat, b]

    n_in = 3 + len(lstm_args) + 2
    kernel = functools.partial(decoder_kernel, num_layers=num_layers, hidden=H)

    output, h_n, c_n = pl.pallas_call(
        kernel,
        out_shape=(
            jax.ShapeDtypeStruct((B, out_size), jnp.float32),
            jax.ShapeDtypeStruct((num_layers, B, H), jnp.float32),
            jax.ShapeDtypeStruct((num_layers, B, H), jnp.float32),
        ),
        in_specs=[_VMEM_SPEC] * n_in,
        out_specs=(_VMEM_SPEC, _VMEM_SPEC, _VMEM_SPEC),
    )(xh0, h0, c0, *lstm_args, w_lin, b_lin)

    return output, (h_n, c_n)


# ----------------------------- parameter creation --------------------------- #

def init_decoder_params(key, output_size, d_model, num_layers,
                        weight_dtype=jnp.float32):
    """PyTorch-style init: uniform(-1/sqrt(H), 1/sqrt(H)).

    Weights are pre-packed for the fused kernel:
      lstm[l]  = (W_cat_l, b_l) with W_cat_l = [W_ih_l^T ; W_hh_l^T]
                 of shape (in_l + H, 4H) and b_l = (b_ih + b_hh) of shape (1, 4H).
      linear   = (W_lin^T (H, O), b_lin (1, O))

    weight_dtype=jnp.bfloat16 halves weight DMA bytes on v6e/v7x (gate math
    stays f32); default f32 matches PyTorch numerics.
    """
    params = {"lstm": []}
    k_lstm = 1.0 / math.sqrt(d_model)
    for l in range(num_layers):
        in_size = output_size if l == 0 else d_model
        key, k1, k2, k3, k4 = jax.random.split(key, 5)
        w_ih = jax.random.uniform(k1, (4 * d_model, in_size), jnp.float32,
                                  -k_lstm, k_lstm)
        w_hh = jax.random.uniform(k2, (4 * d_model, d_model), jnp.float32,
                                  -k_lstm, k_lstm)
        b_ih = jax.random.uniform(k3, (4 * d_model,), jnp.float32, -k_lstm, k_lstm)
        b_hh = jax.random.uniform(k4, (4 * d_model,), jnp.float32, -k_lstm, k_lstm)
        w_cat = jnp.concatenate([w_ih.T, w_hh.T], axis=0).astype(weight_dtype)
        b = (b_ih + b_hh)[None, :].astype(jnp.float32)
        params["lstm"].append((w_cat, b))

    k_lin = 1.0 / math.sqrt(d_model)
    key, k1, k2 = jax.random.split(key, 3)
    w_lin = jax.random.uniform(k1, (output_size, d_model), jnp.float32,
                               -k_lin, k_lin)
    b_lin = jax.random.uniform(k2, (output_size,), jnp.float32, -k_lin, k_lin)
    params["linear"] = (w_lin.T.astype(weight_dtype),
                        b_lin[None, :].astype(jnp.float32))
    return params


# ------------------------------ pure-JAX reference -------------------------- #

def decoder_reference(x, h0, c0, params):
    num_layers, _, H = h0.shape
    layer_in = x
    h_list, c_list = [], []
    for l in range(num_layers):
        w_cat, b = params["lstm"][l]
        xh = jnp.concatenate([layer_in, h0[l]], axis=-1)
        gates = xh @ w_cat.astype(jnp.float32) + b
        i = jax.nn.sigmoid(gates[:, 0 * H:1 * H])
        f = jax.nn.sigmoid(gates[:, 1 * H:2 * H])
        g = jnp.tanh(gates[:, 2 * H:3 * H])
        o = jax.nn.sigmoid(gates[:, 3 * H:4 * H])
        c_new = f * c0[l] + i * g
        h_new = o * jnp.tanh(c_new)
        h_list.append(h_new)
        c_list.append(c_new)
        layer_in = h_new
    w_lin, b_lin = params["linear"]
    out = layer_in @ w_lin.astype(jnp.float32) + b_lin
    return out, (jnp.stack(h_list, 0), jnp.stack(c_list, 0))


# ----------------------------------- main ------------------------------------ #

if __name__ == "__main__":
    B = 2
    output_size = 4
    d_model = 32
    num_layers = 2

    key = jax.random.PRNGKey(0)
    k_params, k_x, k_h, k_c = jax.random.split(key, 4)

    params = init_decoder_params(k_params, output_size, d_model, num_layers)

    x = jax.random.normal(k_x, (B, output_size), jnp.float32)
    h0 = jax.random.normal(k_h, (num_layers, B, d_model), jnp.float32)
    c0 = jax.random.normal(k_c, (num_layers, B, d_model), jnp.float32)

    fwd = jax.jit(functools.partial(decoder_forward, params=params))
    output, (h_n, c_n) = fwd(x, (h0, c0))
    jax.block_until_ready((output, h_n, c_n))

    assert output.shape == (B, output_size)
    assert h_n.shape == (num_layers, B, d_model)
    assert c_n.shape == (num_layers, B, d_model)

    # correctness check against a pure-JAX reference
    out_ref, (h_ref, c_ref) = decoder_reference(x, h0, c0, params)
    assert jnp.allclose(output, out_ref, atol=1e-3, rtol=1e-3)
    assert jnp.allclose(h_n, h_ref, atol=1e-3, rtol=1e-3)
    assert jnp.allclose(c_n, c_ref, atol=1e-3, rtol=1e-3)

    print("KERNEL_OK")
</pallas_src>

<mosaic_0001>
module attributes {stable_mosaic.version = 11 : i64} {
  func.func @decoder_kernel(%arg0: memref<2x36xf32, #tpu.memory_space<vmem>>, %arg1: memref<2x2x32xf32, #tpu.memory_space<vmem>>, %arg2: memref<2x2x32xf32, #tpu.memory_space<vmem>>, %arg3: memref<36x128xf32, #tpu.memory_space<vmem>>, %arg4: memref<1x128xf32, #tpu.memory_space<vmem>>, %arg5: memref<64x128xf32, #tpu.memory_space<vmem>>, %arg6: memref<1x128xf32, #tpu.memory_space<vmem>>, %arg7: memref<32x4xf32, #tpu.memory_space<vmem>>, %arg8: memref<1x4xf32, #tpu.memory_space<vmem>>, %arg9: memref<2x4xf32, #tpu.memory_space<vmem>>, %arg10: memref<2x2x32xf32, #tpu.memory_space<vmem>>, %arg11: memref<2x2x32xf32, #tpu.memory_space<vmem>>) attributes {dimension_semantics = [], scalar_prefetch = 0 : i64, scratch_operands = 0 : i64, tpu.core_type = #tpu.core_type<tc>} {
    %c0 = arith.constant 0 : index
    %c0_0 = arith.constant 0 : index
    %0 = vector.load %arg3[%c0, %c0_0] : memref<36x128xf32, #tpu.memory_space<vmem>>, vector<36x128xf32>
    %c0_1 = arith.constant 0 : index
    %c0_2 = arith.constant 0 : index
    %1 = vector.load %arg4[%c0_1, %c0_2] : memref<1x128xf32, #tpu.memory_space<vmem>>, vector<1x128xf32>
    %c0_3 = arith.constant 0 : index
    %c0_4 = arith.constant 0 : index
    %c0_5 = arith.constant 0 : index
    %2 = vector.load %arg2[%c0_3, %c0_4, %c0_5] : memref<2x2x32xf32, #tpu.memory_space<vmem>>, vector<1x2x32xf32>
    %3 = vector.shape_cast %2 : vector<1x2x32xf32> to vector<2x32xf32>
    %c0_6 = arith.constant 0 : index
    %c0_7 = arith.constant 0 : index
    %4 = vector.load %arg0[%c0_6, %c0_7] : memref<2x36xf32, #tpu.memory_space<vmem>>, vector<2x36xf32>
    %cst = arith.constant dense<0.000000e+00> : vector<2x128xf32>
    %5 = tpu.matmul %4, %0, %cst {dimension_numbers = #tpu.dot_dimension_numbers<[1], [0], [0], [1], [0, 0, 1, 1], [], []>} : vector<2x36xf32>, vector<36x128xf32>, vector<2x128xf32> -> vector<2x128xf32>
    %6 = vector.broadcast %1 : vector<1x128xf32> to vector<2x128xf32>
    %7 = arith.addf %5, %6 : vector<2x128xf32>
    %8 = vector.extract_strided_slice %7 {offsets = [0, 0], sizes = [2, 32], strides = [1, 1]} : vector<2x128xf32> to vector<2x32xf32>
    %9 = arith.negf %8 : vector<2x32xf32>
    %10 = math.exp %9 : vector<2x32xf32>
    %cst_8 = arith.constant 1.000000e+00 : f32
    %11 = vector.broadcast %cst_8 : f32 to vector<2x32xf32>
    %12 = arith.addf %11, %10 : vector<2x32xf32>
    %13 = arith.divf %11, %12 : vector<2x32xf32>
    %14 = vector.extract_strided_slice %7 {offsets = [0, 32], sizes = [2, 32], strides = [1, 1]} : vector<2x128xf32> to vector<2x32xf32>
    %15 = arith.negf %14 : vector<2x32xf32>
    %16 = math.exp %15 : vector<2x32xf32>
    %cst_9 = arith.constant 1.000000e+00 : f32
    %17 = vector.broadcast %cst_9 : f32 to vector<2x32xf32>
    %18 = arith.addf %17, %16 : vector<2x32xf32>
    %19 = arith.divf %17, %18 : vector<2x32xf32>
    %20 = vector.extract_strided_slice %7 {offsets = [0, 64], sizes = [2, 32], strides = [1, 1]} : vector<2x128xf32> to vector<2x32xf32>
    %21 = math.tanh %20 : vector<2x32xf32>
    %22 = vector.extract_strided_slice %7 {offsets = [0, 96], sizes = [2, 32], strides = [1, 1]} : vector<2x128xf32> to vector<2x32xf32>
    %23 = arith.negf %22 : vector<2x32xf32>
    %24 = math.exp %23 : vector<2x32xf32>
    %cst_10 = arith.constant 1.000000e+00 : f32
    %25 = vector.broadcast %cst_10 : f32 to vector<2x32xf32>
    %26 = arith.addf %25, %24 : vector<2x32xf32>
    %27 = arith.divf %25, %26 : vector<2x32xf32>
    %28 = arith.mulf %19, %3 : vector<2x32xf32>
    %29 = arith.mulf %13, %21 : vector<2x32xf32>
    %30 = arith.addf %28, %29 : vector<2x32xf32>
    %31 = math.tanh %30 : vector<2x32xf32>
    %32 = arith.mulf %27, %31 : vector<2x32xf32>
    %c0_11 = arith.constant 0 : index
    %c0_12 = arith.constant 0 : index
    %c0_13 = arith.constant 0 : index
    %33 = vector.load %arg10[%c0_11, %c0_12, %c0_13] : memref<2x2x32xf32, #tpu.memory_space<vmem>>, vector<1x2x32xf32>
    %34 = vector.shape_cast %33 : vector<1x2x32xf32> to vector<2x32xf32>
    %35 = vector.shape_cast %32 : vector<2x32xf32> to vector<1x2x32xf32>
    tpu.vector_store %arg10[%c0_11, %c0_12, %c0_13], %35 {strides = array<i32>} : memref<2x2x32xf32, #tpu.memory_space<vmem>>, vector<1x2x32xf32>,
    %c0_14 = arith.constant 0 : index
    %c0_15 = arith.constant 0 : index
    %c0_16 = arith.constant 0 : index
    %36 = vector.load %arg11[%c0_14, %c0_15, %c0_16] : memref<2x2x32xf32, #tpu.memory_space<vmem>>, vector<1x2x32xf32>
    %37 = vector.shape_cast %36 : vector<1x2x32xf32> to vector<2x32xf32>
    %38 = vector.shape_cast %30 : vector<2x32xf32> to vector<1x2x32xf32>
    tpu.vector_store %arg11[%c0_14, %c0_15, %c0_16], %38 {strides = array<i32>} : memref<2x2x32xf32, #tpu.memory_space<vmem>>, vector<1x2x32xf32>,
    %c0_17 = arith.constant 0 : index
    %c0_18 = arith.constant 0 : index
    %39 = vector.load %arg5[%c0_17, %c0_18] : memref<64x128xf32, #tpu.memory_space<vmem>>, vector<64x128xf32>
    %c0_19 = arith.constant 0 : index
    %c0_20 = arith.constant 0 : index
    %40 = vector.load %arg6[%c0_19, %c0_20] : memref<1x128xf32, #tpu.memory_space<vmem>>, vector<1x128xf32>
    %c1 = arith.constant 1 : index
    %c0_21 = arith.constant 0 : index
    %c0_22 = arith.constant 0 : index
    %41 = vector.load %arg1[%c1, %c0_21, %c0_22] : memref<2x2x32xf32, #tpu.memory_space<vmem>>, vector<1x2x32xf32>
    %42 = vector.shape_cast %41 : vector<1x2x32xf32> to vector<2x32xf32>
    %c1_23 = arith.constant 1 : index
    %c0_24 = arith.constant 0 : index
    %c0_25 = arith.constant 0 : index
    %43 = vector.load %arg2[%c1_23, %c0_24, %c0_25] : memref<2x2x32xf32, #tpu.memory_space<vmem>>, vector<1x2x32xf32>
    %44 = vector.shape_cast %43 : vector<1x2x32xf32> to vector<2x32xf32>
    %45 = tpu.concatenate %32, %42 in 1 : vector<2x32xf32>, vector<2x32xf32> -> vector<2x64xf32>
    %cst_26 = arith.constant dense<0.000000e+00> : vector<2x128xf32>
    %46 = tpu.matmul %45, %39, %cst_26 {dimension_numbers = #tpu.dot_dimension_numbers<[1], [0], [0], [1], [0, 0, 1, 1], [], []>} : vector<2x64xf32>, vector<64x128xf32>, vector<2x128xf32> -> vector<2x128xf32>
    %47 = vector.broadcast %40 : vector<1x128xf32> to vector<2x128xf32>
    %48 = arith.addf %46, %47 : vector<2x128xf32>
    %49 = vector.extract_strided_slice %48 {offsets = [0, 0], sizes = [2, 32], strides = [1, 1]} : vector<2x128xf32> to vector<2x32xf32>
    %50 = arith.negf %49 : vector<2x32xf32>
    %51 = math.exp %50 : vector<2x32xf32>
    %cst_27 = arith.constant 1.000000e+00 : f32
    %52 = vector.broadcast %cst_27 : f32 to vector<2x32xf32>
    %53 = arith.addf %52, %51 : vector<2x32xf32>
    %54 = arith.divf %52, %53 : vector<2x32xf32>
    %55 = vector.extract_strided_slice %48 {offsets = [0, 32], sizes = [2, 32], strides = [1, 1]} : vector<2x128xf32> to vector<2x32xf32>
    %56 = arith.negf %55 : vector<2x32xf32>
    %57 = math.exp %56 : vector<2x32xf32>
    %cst_28 = arith.constant 1.000000e+00 : f32
    %58 = vector.broadcast %cst_28 : f32 to vector<2x32xf32>
    %59 = arith.addf %58, %57 : vector<2x32xf32>
    %60 = arith.divf %58, %59 : vector<2x32xf32>
    %61 = vector.extract_strided_slice %48 {offsets = [0, 64], sizes = [2, 32], strides = [1, 1]} : vector<2x128xf32> to vector<2x32xf32>
    %62 = math.tanh %61 : vector<2x32xf32>
    %63 = vector.extract_strided_slice %48 {offsets = [0, 96], sizes = [2, 32], strides = [1, 1]} : vector<2x128xf32> to vector<2x32xf32>
    %64 = arith.negf %63 : vector<2x32xf32>
    %65 = math.exp %64 : vector<2x32xf32>
    %cst_29 = arith.constant 1.000000e+00 : f32
    %66 = vector.broadcast %cst_29 : f32 to vector<2x32xf32>
    %67 = arith.addf %66, %65 : vector<2x32xf32>
    %68 = arith.divf %66, %67 : vector<2x32xf32>
    %69 = arith.mulf %60, %44 : vector<2x32xf32>
    %70 = arith.mulf %54, %62 : vector<2x32xf32>
    %71 = arith.addf %69, %70 : vector<2x32xf32>
    %72 = math.tanh %71 : vector<2x32xf32>
    %73 = arith.mulf %68, %72 : vector<2x32xf32>
    %c1_30 = arith.constant 1 : index
    %c0_31 = arith.constant 0 : index
    %c0_32 = arith.constant 0 : index
    %74 = vector.load %arg10[%c1_30, %c0_31, %c0_32] : memref<2x2x32xf32, #tpu.memory_space<vmem>>, vector<1x2x32xf32>
    %75 = vector.shape_cast %74 : vector<1x2x32xf32> to vector<2x32xf32>
    %76 = vector.shape_cast %73 : vector<2x32xf32> to vector<1x2x32xf32>
    tpu.vector_store %arg10[%c1_30, %c0_31, %c0_32], %76 {strides = array<i32>} : memref<2x2x32xf32, #tpu.memory_space<vmem>>, vector<1x2x32xf32>,
    %c1_33 = arith.constant 1 : index
    %c0_34 = arith.constant 0 : index
    %c0_35 = arith.constant 0 : index
    %77 = vector.load %arg11[%c1_33, %c0_34, %c0_35] : memref<2x2x32xf32, #tpu.memory_space<vmem>>, vector<1x2x32xf32>
    %78 = vector.shape_cast %77 : vector<1x2x32xf32> to vector<2x32xf32>
    %79 = vector.shape_cast %71 : vector<2x32xf32> to vector<1x2x32xf32>
    tpu.vector_store %arg11[%c1_33, %c0_34, %c0_35], %79 {strides = array<i32>} : memref<2x2x32xf32, #tpu.memory_space<vmem>>, vector<1x2x32xf32>,
    %c0_36 = arith.constant 0 : index
    %c0_37 = arith.constant 0 : index
    %80 = vector.load %arg7[%c0_36, %c0_37] : memref<32x4xf32, #tpu.memory_space<vmem>>, vector<32x4xf32>
    %cst_38 = arith.constant dense<0.000000e+00> : vector<2x4xf32>
    %81 = tpu.matmul %73, %80, %cst_38 {dimension_numbers = #tpu.dot_dimension_numbers<[1], [0], [0], [1], [0, 0, 1, 1], [], []>} : vector<2x32xf32>, vector<32x4xf32>, vector<2x4xf32> -> vector<2x4xf32>
    %c0_39 = arith.constant 0 : index
    %c0_40 = arith.constant 0 : index
    %82 = vector.load %arg8[%c0_39, %c0_40] : memref<1x4xf32, #tpu.memory_space<vmem>>, vector<1x4xf32>
    %83 = vector.broadcast %82 : vector<1x4xf32> to vector<2x4xf32>
    %84 = arith.addf %81, %83 : vector<2x4xf32>
    %c0_41 = arith.constant 0 : index
    %c0_42 = arith.constant 0 : index
    %85 = vector.load %arg9[%c0_41, %c0_42] : memref<2x4xf32, #tpu.memory_space<vmem>>, vector<2x4xf32>
    tpu.vector_store %arg9[%c0_41, %c0_42], %84 {strides = array<i32>} : memref<2x4xf32, #tpu.memory_space<vmem>>, vector<2x4xf32>,
    return
  }
}

</mosaic_0001>

<llo_original>
// kernel: decoder_forward.1
$region0: #{decoder_forward.1}
  #allocation0 [shape = 'u32[]', space=smem, size = 0x4, offset = 0x4, fixed_abs, tag = 'smem constant byte address 0x4 - core index']
  #allocation1 [shape = 'u32[144,128]{1,0:T(1,128)}', space=vmem, size = 0x12000, scoped, tag = 'internal scratch']
  %s0 = inlined_call_operand.vmem [shape: f32[2,36], index: 0, kind: input, shape index: {}]
  %s1 = inlined_call_operand.vmem [shape: f32[2,2,32], index: 1, kind: input, shape index: {}]
  %s2 = inlined_call_operand.hbm [shape: f32[2,2,32], index: 2, kind: input, shape index: {}]
  %s3 = inlined_call_operand.hbm [shape: f32[36,128], index: 3, kind: input, shape index: {}]
  %s4 = inlined_call_operand.hbm [shape: f32[1,128], index: 4, kind: input, shape index: {}]
  %s5 = inlined_call_operand.hbm [shape: f32[64,128], index: 5, kind: input, shape index: {}]
  %s6 = inlined_call_operand.hbm [shape: f32[1,128], index: 6, kind: input, shape index: {}]
  %s7 = inlined_call_operand.vmem [shape: f32[32,4], index: 7, kind: input, shape index: {}]
  %s8 = inlined_call_operand.vmem [shape: f32[1,4], index: 8, kind: input, shape index: {}]
  %s9 = inlined_call_operand.hbm [shape: f32[2,4], index: 9, kind: output, shape index: {0}]
  %s10 = inlined_call_operand.hbm [shape: f32[2,2,32], index: 10, kind: output, shape index: {1}]
  %s11 = inlined_call_operand.hbm [shape: f32[2,2,32], index: 11, kind: output, shape index: {2}]
  %12 = xla_tuple %s9, %s10, %s11
  %s13 = sld [smem:[#allocation0]]
  $region82: #{decoder_forward.1} parent=0
    _
  %s15 = ssub.s32 1, %s13
  %s16 = scalar_select 0, %s15, %s13
  $region1: #{decoder_forward.1} parent=0
    #allocation2 [shape = 'u8[2048]{0}', space=vmem, size = 0x800, scoped, tag = 'input window, operand 2, single buffered']
    #allocation3 [shape = 's32[1]{0}', space=sflag, size = 0x4, scoped, tag = 'scoped memory for decoder_forward.1']
    #allocation4 [shape = 's32[1]{0}', space=sflag, size = 0x4, scoped, tag = 'scoped memory for decoder_forward.1']
    #allocation5 [shape = 'u8[20480]{0}', space=vmem, size = 0x5000, scoped, tag = 'input window, operand 3, single buffered']
    #allocation6 [shape = 's32[1]{0}', space=sflag, size = 0x4, scoped, tag = 'scoped memory for decoder_forward.1']
    #allocation7 [shape = 'u8[512]{0}', space=vmem, size = 0x400, scoped, tag = 'input window, operand 4, single buffered']
    #allocation8 [shape = 'u8[32768]{0}', space=vmem, size = 0x8000, scoped, tag = 'input window, operand 5, single buffered']
    #allocation9 [shape = 's32[1]{0}', space=sflag, size = 0x4, scoped, tag = 'scoped memory for decoder_forward.1']
    #allocation10 [shape = 'u8[512]{0}', space=vmem, size = 0x400, scoped, tag = 'input window, operand 6, single buffered']
    #allocation11 [shape = 'u8[1024]{0}', space=vmem, size = 0x400, scoped, tag = 'output window, operand 0, single buffered']
    #allocation12 [shape = 'u8[2048]{0}', space=vmem, size = 0x800, scoped, tag = 'output window, operand 1, single buffered']
    #allocation13 [shape = 's32[1]{0}', space=sflag, size = 0x4, scoped, tag = 'scoped memory for decoder_forward.1']
    #allocation14 [shape = 'u8[2048]{0}', space=vmem, size = 0x800, scoped, tag = 'output window, operand 2, single buffered']
    %17 = vsyncpa [#allocation3], 0
    %18 = vsyncpa [#allocation6], 0
    %19 = vsyncpa [#allocation9], 0
    %20 = vsyncpa [#allocation4], 0
    %21 = vsyncpa [#allocation13], 0
    // Predicated region
    $region2: #{decoder_forward.1} parent=1 // pred_check
      _
    $region3: #{decoder_forward.1} parent=1 // pred_check_branch
      %23 = sbr.rel (0) target = $region5
    $region4: #{decoder_forward.1} parent=1 // pred_region
      _
    $region5: #{decoder_forward.1} parent=1 // pred_fallthru
      _
    // Predicated region
    $region6: #{decoder_forward.1} parent=1 // pred_check
      _
    $region7: #{decoder_forward.1} parent=1 // pred_check_branch
      %25 = sbr.rel (0) target = $region9
    $region8: #{decoder_forward.1} parent=1 // pred_region
      _
    $region9: #{decoder_forward.1} parent=1 // pred_fallthru
      _
    // Predicated region
    $region10: #{decoder_forward.1} parent=1 // pred_check
      _
    $region11: #{decoder_forward.1} parent=1 // pred_check_branch
      %27 = sbr.rel (0) target = $region13
    $region12: #{decoder_forward.1} parent=1 // pred_region
      %s29 = ssub.s32 64, 64
      %30 = vsyncadd [#allocation3], %s29
      %s31 = sshll.u32 [#allocation2], 4
      %s32 = int_to_ptr.vmem [resolvable:$true] %s31
      %37 = dma.hbm_to_vmem [thread:$0]  %s2, 64, %s32, [#allocation3], 32, 32, 2
    $region13: #{decoder_forward.1} parent=1 // pred_fallthru
      _
    // Predicated region
    $region14: #{decoder_forward.1} parent=1 // pred_check
      _
    $region15: #{decoder_forward.1} parent=1 // pred_check_branch
      %39 = sbr.rel (0) target = $region17
    $region16: #{decoder_forward.1} parent=1 // pred_region
      %s41 = ssub.s32 640, 640
      %42 = vsyncadd [#allocation6], %s41
      %s43 = sshll.u32 [#allocation5], 4
      %s44 = int_to_ptr.vmem [resolvable:$true] %s43
      %49 = dma.hbm_to_vmem [thread:$0]  %s3, 640, %s44, [#allocation6], 128, 128, 8
    $region17: #{decoder_forward.1} parent=1 // pred_fallthru
      _
    // Predicated region
    $region18: #{decoder_forward.1} parent=1 // pred_check
      _
    $region19: #{decoder_forward.1} parent=1 // pred_check_branch
      %51 = sbr.rel (0) target = $region21
    $region20: #{decoder_forward.1} parent=1 // pred_region
      %s53 = ssub.s32 16, 16
      %54 = vsyncadd [#allocation6], %s53
      %s56 = sshll.u32 [#allocation7], 4
      %s57 = int_to_ptr.vmem [resolvable:$true] %s56
      %59 = dma.hbm_to_vmem [thread:$0]  %s4, 16, %s57, [#allocation6]
    $region21: #{decoder_forward.1} parent=1 // pred_fallthru
      _
    // Predicated region
    $region22: #{decoder_forward.1} parent=1 // pred_check
      _
    $region23: #{decoder_forward.1} parent=1 // pred_check_branch
      %61 = sbr.rel (0) target = $region25
    $region24: #{decoder_forward.1} parent=1 // pred_region
      %s63 = ssub.s32 1024, 1024
      %64 = vsyncadd [#allocation9], %s63
      %s65 = sshll.u32 [#allocation8], 4
      %s66 = int_to_ptr.vmem [resolvable:$true] %s65
      %71 = dma.hbm_to_vmem [thread:$0]  %s5, 1024, %s66, [#allocation9], 128, 128, 8
    $region25: #{decoder_forward.1} parent=1 // pred_fallthru
      _
    // Predicated region
    $region26: #{decoder_forward.1} parent=1 // pred_check
      _
    $region27: #{decoder_forward.1} parent=1 // pred_check_branch
      %73 = sbr.rel (0) target = $region29
    $region28: #{decoder_forward.1} parent=1 // pred_region
      %s75 = ssub.s32 16, 16
      %76 = vsyncadd [#allocation9], %s75
      %s78 = sshll.u32 [#allocation10], 4
      %s79 = int_to_ptr.vmem [resolvable:$true] %s78
      %81 = dma.hbm_to_vmem [thread:$0]  %s6, 16, %s79, [#allocation9]
    $region29: #{decoder_forward.1} parent=1 // pred_fallthru
      _
    // Predicated region
    $region30: #{decoder_forward.1} parent=1 // pred_check
      _
    $region31: #{decoder_forward.1} parent=1 // pred_check_branch
      %83 = sbr.rel (0) target = $region33
    $region32: #{decoder_forward.1} parent=1 // pred_region
      _
    $region33: #{decoder_forward.1} parent=1 // pred_fallthru
      _
    // Predicated region
    $region34: #{decoder_forward.1} parent=1 // pred_check
      _
    $region35: #{decoder_forward.1} parent=1 // pred_check_branch
      %85 = sbr.rel (0) target = $region37
    $region36: #{decoder_forward.1} parent=1 // pred_region
      _
    $region37: #{decoder_forward.1} parent=1 // pred_fallthru
      _
    // Predicated region
    $region38: #{decoder_forward.1} parent=1 // pred_check
      _
    $region39: #{decoder_forward.1} parent=1 // pred_check_branch
      %87 = sbr.rel (0) target = $region41
    $region40: #{decoder_forward.1} parent=1 // pred_region
      %88 = dma.done [#allocation3], 64
    $region41: #{decoder_forward.1} parent=1 // pred_fallthru
      _
    // Predicated region
    $region42: #{decoder_forward.1} parent=1 // pred_check
      _
    $region43: #{decoder_forward.1} parent=1 // pred_check_branch
      %90 = sbr.rel (0) target = $region45
    $region44: #{decoder_forward.1} parent=1 // pred_region
      %91 = dma.done [#allocation6], 640
    $region45: #{decoder_forward.1} parent=1 // pred_fallthru
      _
    // Predicated region
    $region46: #{decoder_forward.1} parent=1 // pred_check
      _
    $region47: #{decoder_forward.1} parent=1 // pred_check_branch
      %93 = sbr.rel (0) target = $region49
    $region48: #{decoder_forward.1} parent=1 // pred_region
      %94 = dma.done [#allocation6], 16
    $region49: #{decoder_forward.1} parent=1 // pred_fallthru
      _
    // Predicated region
    $region50: #{decoder_forward.1} parent=1 // pred_check
      _
    $region51: #{decoder_forward.1} parent=1 // pred_check_branch
      %96 = sbr.rel (0) target = $region53
    $region52: #{decoder_forward.1} parent=1 // pred_region
      %97 = dma.done [#allocation9], 1024
    $region53: #{decoder_forward.1} parent=1 // pred_fallthru
      _
    // Predicated region
    $region54: #{decoder_forward.1} parent=1 // pred_check
      _
    $region55: #{decoder_forward.1} parent=1 // pred_check_branch
      %99 = sbr.rel (0) target = $region57
    $region56: #{decoder_forward.1} parent=1 // pred_region
      %100 = dma.done [#allocation9], 16
    $region57: #{decoder_forward.1} parent=1 // pred_fallthru
      _
    %v101 = vld [vmem:[#allocation5] sm:$0xff]
    %v102 = vld [vmem:[#allocation5 + $0x8] sm:$0xff]
    %v103 = vld [vmem:[#allocation5 + $0x10] sm:$0xff]
    %v104 = vld [vmem:[#allocation5 + $0x18] sm:$0xff]
    %v105 = vld [vmem:[#allocation5 + $0x20] sm:$0xf]
    %v106 = vld [vmem:[#allocation7] sm:$0x1]
    %v107 = vld [vmem:[#allocation2] sm:$0x3]
    %v108 = vld [vmem:[%s0] sm:$0x3]
    %v110 = vlaneseq
    %v111 = vshrl.u32 %v110, 7
    %v112 = vsub.s32 0, %v111
    %v113 = vrot.slane %v106, %v112
    %vm115 = vcmask 293888
    %v117 = vsel %vm115, %v108, 0
    %vm119 = vcmask 1043456
    %v121 = vsel %vm119, %v105, 0
    %123 = vmatprep.subr.mxu0 0.0
    %124 = vmatpush1.msra.mxu0 %v101
    %125 = vmatprep.subr.mxu0 0.0
    %126 = vmatpush1.msra.mxu0 %v102
    %127 = vmatprep.subr.mxu0 0.0
    %128 = vmatpush1.msra.mxu0 %v103
    %129 = vmatprep.subr.mxu0 0.0
    %130 = vmatpush1.msra.mxu0 %v104
    %131 = vmatprep.subr.mxu0 0.0
    %132 = vmatpush1.msra.mxu0 %v121
    %133 = vmatprep.subr.mxu0 0.0
    %134 = vmatpush1.msra.mxu0 0.0
    %135 = vmatprep.subr.mxu0 0.0
    %136 = vmatpush1.msra.mxu0 0.0
    %137 = vmatprep.subr.mxu0 0.0
    %138 = vmatpush1.msra.mxu0 0.0
    %139 = vmatprep.subr.mxu0 0.0
    %140 = vmatpush1.msra.mxu0 0.0
    %141 = vmatprep.subr.mxu0 0.0
    %142 = vmatpush1.msra.mxu0 0.0
    %143 = vmatprep.subr.mxu0 0.0
    %144 = vmatpush1.msra.mxu0 0.0
    %145 = vmatprep.subr.mxu0 0.0
    %146 = vmatpush1.msra.mxu0 0.0
    %147 = vmatprep.subr.mxu0 0.0
    %148 = vmatpush1.msra.mxu0 0.0
    %149 = vmatprep.subr.mxu0 0.0
    %150 = vmatpush1.msra.mxu0 0.0
    %151 = vmatprep.subr.mxu0 0.0
    %152 = vmatpush1.msra.mxu0 0.0
    %153 = vmatprep.subr.mxu0 0.0
    %154 = vmatpush1.msra.mxu0 0.0
    %155 = vmatprep.subr.mxu0 0.0
    %156 = vmatpush1.msra.mxu0 0.0
    %157 = vmatprep.subr.mxu0 0.0
    %158 = vmatpush1.msra.mxu0 0.0
    %159 = vmatprep.subr.mxu0 0.0
    %160 = vmatpush1.msra.mxu0 0.0
    %161 = vmatprep.subr.mxu0 0.0
    %162 = vmatpush1.msra.mxu0 0.0
    %163 = vmatprep.subr.mxu0 0.0
    %164 = vmatpush1.msra.mxu0 0.0
    %165 = vmatprep.subr.mxu0 0.0
    %166 = vmatpush1.msra.mxu0 0.0
    %167 = vmatprep.subr.mxu0 0.0
    %168 = vmatpush1.msra.mxu0 0.0
    %169 = vmatprep.subr.mxu0 0.0
    %170 = vmatpush1.msra.mxu0 0.0
    %171 = vmatprep.subr.mxu0 0.0
    %172 = vmatpush1.msra.mxu0 0.0
    %173 = vmatprep.subr.mxu0 0.0
    %174 = vmatpush1.msra.mxu0 0.0
    %175 = vmatprep.subr.mxu0 0.0
    %176 = vmatpush1.msra.mxu0 0.0
    %177 = vmatprep.subr.mxu0 0.0
    %178 = vmatpush1.msra.mxu0 0.0
    %179 = vmatprep.subr.mxu0 0.0
    %180 = vmatpush1.msra.mxu0 0.0
    %181 = vmatprep.subr.mxu0 0.0
    %182 = vmatpush1.msra.mxu0 0.0
    %183 = vmatprep.subr.mxu0 0.0
    %184 = vmatpush1.msra.mxu0 0.0
    %185 = vmatprep.subr.mxu0 0.0
    %186 = vmatpush1.msra.mxu0 0.0
    %187 = vmatprep.mubr.f32.mxu0 0.0
    %188 = vmatmul.mubr.f32.gmra.mrb[0].mxu0 %v117
    %v189 = vpop.f32.mrb[0].mxu0
    %v190 = vadd.f32 %v113, %v189
    %v191 = vpop.f32.mrb[0].mxu0
    %192 = vdwg.mxu0
    %v193 = vxor.u32 %v190, 2147483648
    %v194 = vmul.f32 %v193, 1.442695
    %v195 = vpow.pop %v194
    %v196 = vadd.f32 %v195, 1.0
    %v197 = vrcp.pop %v196
    %v198 = vmul.f32 1.0, %v197
    %v199 = vtanh.pop %v190
    %201 = vrot.lane.b32.xlu0 %v107, 32
    %v202 = vpop.permute.xlu0 %201
    %v204 = vmul.f32 %v198, %v202
    %206 = vrot.lane.b32.xlu0 %v199, 64
    %v207 = vpop.permute.xlu0 %206
    %v209 = vmul.f32 %v198, %v207
    %211 = vrot.lane.b32.xlu0 %v209, 32
    %v212 = vpop.permute.xlu0 %211
    %v214 = vadd.f32 %v204, %v212
    %v215 = vtanh.pop %v214
    %217 = vrot.lane.b32.xlu0 %v215, 64
    %v218 = vpop.permute.xlu0 %217
    %v220 = vmul.f32 %v198, %v218
    %222 = vrot.lane.b32.xlu0 %v220, 32
    %v223 = vpop.permute.xlu0 %222
    %vm225 = vcmask 254976
    %226 = vst.msk [vmem:[#allocation12] sm:$0x3] %vm225, %v223
    %228 = vrot.lane.b32.xlu0 %v214, 96
    %v229 = vpop.permute.xlu0 %228
    %231 = vst.msk [vmem:[#allocation14] sm:$0x3] %vm225, %v229
    %v232 = vld [vmem:[#allocation8] sm:$0xff]
    %v233 = vld [vmem:[#allocation8 + $0x8] sm:$0xff]
    %v234 = vld [vmem:[#allocation8 + $0x10] sm:$0xff]
    %v235 = vld [vmem:[#allocation8 + $0x18] sm:$0xff]
    %v236 = vld [vmem:[#allocation8 + $0x20] sm:$0xff]
    %v237 = vld [vmem:[#allocation8 + $0x28] sm:$0xff]
    %v238 = vld [vmem:[#allocation8 + $0x30] sm:$0xff]
    %v239 = vld [vmem:[#allocation8 + $0x38] sm:$0xff]
    %v240 = vld [vmem:[#allocation10] sm:$0x1]
    %s241 = scalar_lea.vmem %s1, 2
    %v242 = vld [vmem:[%s241] sm:$0x3]
    %s243 = scalar_lea.vmem [#allocation2], 2
    %v244 = vld [vmem:[%s243] sm:$0x3]
    %246 = vrot.lane.b32.xlu0 %v242, 32
    %v247 = vpop.permute.xlu0 %246
    %vm249 = vcmask 261120
    %v250 = vsel %vm249, %v223, %v247
    %v252 = vlaneseq
    %v253 = vshrl.u32 %v252, 7
    %v254 = vsub.s32 0, %v253
    %v255 = vrot.slane %v240, %v254
    %vm257 = vcmask 523264
    %v259 = vsel %vm257, %v250, 0
    %261 = vmatprep.subr.mxu0 0.0
    %262 = vmatpush1.msra.mxu0 %v232
    %263 = vmatprep.subr.mxu0 0.0
    %264 = vmatpush1.msra.mxu0 %v233
    %265 = vmatprep.subr.mxu0 0.0
    %266 = vmatpush1.msra.mxu0 %v234
    %267 = vmatprep.subr.mxu0 0.0
    %268 = vmatpush1.msra.mxu0 %v235
    %269 = vmatprep.subr.mxu0 0.0
    %270 = vmatpush1.msra.mxu0 %v236
    %271 = vmatprep.subr.mxu0 0.0
    %272 = vmatpush1.msra.mxu0 %v237
    %273 = vmatprep.subr.mxu0 0.0
    %274 = vmatpush1.msra.mxu0 %v238
    %275 = vmatprep.subr.mxu0 0.0
    %276 = vmatpush1.msra.mxu0 %v239
    %277 = vmatprep.subr.mxu0 0.0
    %278 = vmatpush1.msra.mxu0 0.0
    %279 = vmatprep.subr.mxu0 0.0
    %280 = vmatpush1.msra.mxu0 0.0
    %281 = vmatprep.subr.mxu0 0.0
    %282 = vmatpush1.msra.mxu0 0.0
    %283 = vmatprep.subr.mxu0 0.0
    %284 = vmatpush1.msra.mxu0 0.0
    %285 = vmatprep.subr.mxu0 0.0
    %286 = vmatpush1.msra.mxu0 0.0
    %287 = vmatprep.subr.mxu0 0.0
    %288 = vmatpush1.msra.mxu0 0.0
    %289 = vmatprep.subr.mxu0 0.0
    %290 = vmatpush1.msra.mxu0 0.0
    %291 = vmatprep.subr.mxu0 0.0
    %292 = vmatpush1.msra.mxu0 0.0
    %293 = vmatprep.subr.mxu0 0.0
    %294 = vmatpush1.msra.mxu0 0.0
    %295 = vmatprep.subr.mxu0 0.0
    %296 = vmatpush1.msra.mxu0 0.0
    %297 = vmatprep.subr.mxu0 0.0
    %298 = vmatpush1.msra.mxu0 0.0
    %299 = vmatprep.subr.mxu0 0.0
    %300 = vmatpush1.msra.mxu0 0.0
    %301 = vmatprep.subr.mxu0 0.0
    %302 = vmatpush1.msra.mxu0 0.0
    %303 = vmatprep.subr.mxu0 0.0
    %304 = vmatpush1.msra.mxu0 0.0
    %305 = vmatprep.subr.mxu0 0.0
    %306 = vmatpush1.msra.mxu0 0.0
    %307 = vmatprep.subr.mxu0 0.0
    %308 = vmatpush1.msra.mxu0 0.0
    %309 = vmatprep.subr.mxu0 0.0
    %310 = vmatpush1.msra.mxu0 0.0
    %311 = vmatprep.subr.mxu0 0.0
    %312 = vmatpush1.msra.mxu0 0.0
    %313 = vmatprep.subr.mxu0 0.0
    %314 = vmatpush1.msra.mxu0 0.0
    %315 = vmatprep.subr.mxu0 0.0
    %316 = vmatpush1.msra.mxu0 0.0
    %317 = vmatprep.subr.mxu0 0.0
    %318 = vmatpush1.msra.mxu0 0.0
    %319 = vmatprep.subr.mxu0 0.0
    %320 = vmatpush1.msra.mxu0 0.0
    %321 = vmatprep.subr.mxu0 0.0
    %322 = vmatpush1.msra.mxu0 0.0
    %323 = vmatprep.subr.mxu0 0.0
    %324 = vmatpush1.msra.mxu0 0.0
    %325 = vmatprep.mubr.f32.mxu0 0.0
    %326 = vmatmul.mubr.f32.gmra.mrb[0].mxu0 %v259
    %v327 = vpop.f32.mrb[0].mxu0
    %v328 = vadd.f32 %v255, %v327
    %v329 = vpop.f32.mrb[0].mxu0
    %330 = vdwg.mxu0
    %v331 = vxor.u32 %v328, 2147483648
    %v332 = vmul.f32 %v331, 1.442695
    %v333 = vpow.pop %v332
    %v334 = vadd.f32 %v333, 1.0
    %v335 = vrcp.pop %v334
    %v336 = vmul.f32 1.0, %v335
    %v337 = vtanh.pop %v328
    %339 = vrot.lane.b32.xlu0 %v244, 32
    %v340 = vpop.permute.xlu0 %339
    %v342 = vmul.f32 %v336, %v340
    %344 = vrot.lane.b32.xlu0 %v337, 64
    %v345 = vpop.permute.xlu0 %344
    %v347 = vmul.f32 %v336, %v345
    %349 = vrot.lane.b32.xlu0 %v347, 32
    %v350 = vpop.permute.xlu0 %349
    %v352 = vadd.f32 %v342, %v350
    %v353 = vtanh.pop %v352
    %355 = vrot.lane.b32.xlu0 %v353, 64
    %v356 = vpop.permute.xlu0 %355
    %v358 = vmul.f32 %v336, %v356
    %360 = vrot.lane.b32.xlu0 %v358, 32
    %v361 = vpop.permute.xlu0 %360
    %s363 = scalar_lea.vmem [#allocation12], 2
    %364 = vst.msk [vmem:[%s363] sm:$0x3] %vm225, %v361
    %366 = vrot.lane.b32.xlu0 %v352, 96
    %v367 = vpop.permute.xlu0 %366
    %s369 = scalar_lea.vmem [#allocation14], 2
    %370 = vst.msk [vmem:[%s369] sm:$0x3] %vm225, %v367
    %v371 = vld [vmem:[%s7] sm:$0xff]
    %v372 = vld [vmem:[%s7 + $0x8] sm:$0xff]
    %v373 = vld [vmem:[%s7 + $0x10] sm:$0xff]
    %v374 = vld [vmem:[%s7 + $0x18] sm:$0xff]
    %v375 = vld [vmem:[%s8] sm:$0x1]
    %v377 = vlaneseq
    %v378 = vshrl.u32 %v377, 7
    %v379 = vsub.s32 0, %v378
    %v380 = vrot.slane %v375, %v379
    %v382 = vsel %vm249, %v361, 0
    %384 = vmatprep.subr.mxu0 0.0
    %385 = vmatpush1.msra.mxu0 %v371
    %386 = vmatprep.subr.mxu0 0.0
    %387 = vmatpush1.msra.mxu0 %v372
    %388 = vmatprep.subr.mxu0 0.0
    %389 = vmatpush1.msra.mxu0 %v373
    %390 = vmatprep.subr.mxu0 0.0
    %391 = vmatpush1.msra.mxu0 %v374
    %392 = vmatprep.subr.mxu0 0.0
    %393 = vmatpush1.msra.mxu0 0.0
    %394 = vmatprep.subr.mxu0 0.0
    %395 = vmatpush1.msra.mxu0 0.0
    %396 = vmatprep.subr.mxu0 0.0
    %397 = vmatpush1.msra.mxu0 0.0
    %398 = vmatprep.subr.mxu0 0.0
    %399 = vmatpush1.msra.mxu0 0.0
    %400 = vmatprep.subr.mxu0 0.0
    %401 = vmatpush1.msra.mxu0 0.0
    %402 = vmatprep.subr.mxu0 0.0
    %403 = vmatpush1.msra.mxu0 0.0
    %404 = vmatprep.subr.mxu0 0.0
    %405 = vmatpush1.msra.mxu0 0.0
    %406 = vmatprep.subr.mxu0 0.0
    %407 = vmatpush1.msra.mxu0 0.0
    %408 = vmatprep.subr.mxu0 0.0
    %409 = vmatpush1.msra.mxu0 0.0
    %410 = vmatprep.subr.mxu0 0.0
    %411 = vmatpush1.msra.mxu0 0.0
    %412 = vmatprep.subr.mxu0 0.0
    %413 = vmatpush1.msra.mxu0 0.0
    %414 = vmatprep.subr.mxu0 0.0
    %415 = vmatpush1.msra.mxu0 0.0
    %416 = vmatprep.subr.mxu0 0.0
    %417 = vmatpush1.msra.mxu0 0.0
    %418 = vmatprep.subr.mxu0 0.0
    %419 = vmatpush1.msra.mxu0 0.0
    %420 = vmatprep.subr.mxu0 0.0
    %421 = vmatpush1.msra.mxu0 0.0
    %422 = vmatprep.subr.mxu0 0.0
    %423 = vmatpush1.msra.mxu0 0.0
    %424 = vmatprep.subr.mxu0 0.0
    %425 = vmatpush1.msra.mxu0 0.0
    %426 = vmatprep.subr.mxu0 0.0
    %427 = vmatpush1.msra.mxu0 0.0
    %428 = vmatprep.subr.mxu0 0.0
    %429 = vmatpush1.msra.mxu0 0.0
    %430 = vmatprep.subr.mxu0 0.0
    %431 = vmatpush1.msra.mxu0 0.0
    %432 = vmatprep.subr.mxu0 0.0
    %433 = vmatpush1.msra.mxu0 0.0
    %434 = vmatprep.subr.mxu0 0.0
    %435 = vmatpush1.msra.mxu0 0.0
    %436 = vmatprep.subr.mxu0 0.0
    %437 = vmatpush1.msra.mxu0 0.0
    %438 = vmatprep.subr.mxu0 0.0
    %439 = vmatpush1.msra.mxu0 0.0
    %440 = vmatprep.subr.mxu0 0.0
    %441 = vmatpush1.msra.mxu0 0.0
    %442 = vmatprep.subr.mxu0 0.0
    %443 = vmatpush1.msra.mxu0 0.0
    %444 = vmatprep.subr.mxu0 0.0
    %445 = vmatpush1.msra.mxu0 0.0
    %446 = vmatprep.subr.mxu0 0.0
    %447 = vmatpush1.msra.mxu0 0.0
    %448 = vmatprep.mubr.f32.mxu0 0.0
    %449 = vmatmul.mubr.f32.gmra.mrb[0].mxu0 %v382
    %v450 = vpop.f32.mrb[0].mxu0
    %v451 = vadd.f32 %v380, %v450
    %v452 = vpop.f32.mrb[0].mxu0
    %453 = vdwg.mxu0
    %vm454 = vcmask 25600
    %455 = vst.msk [vmem:[#allocation11] sm:$0x3] %vm454, %v451
    // Predicated region
    $region58: #{decoder_forward.1} parent=1 // pred_check
      _
    $region59: #{decoder_forward.1} parent=1 // pred_check_branch
      %457 = sbr.rel (0) target = $region61
    $region60: #{decoder_forward.1} parent=1 // pred_region
      %s459 = ssub.s32 32, 32
      %460 = vsyncadd [#allocation4], %s459
      %s462 = sshll.u32 [#allocation11], 4
      %s463 = int_to_ptr.vmem [resolvable:$true] %s462
      %465 = dma.vmem_to_hbm [thread:$0]  %s463, 32, %s9, [#allocation4]
    $region61: #{decoder_forward.1} parent=1 // pred_fallthru
      _
    // Predicated region
    $region62: #{decoder_forward.1} parent=1 // pred_check
      _
    $region63: #{decoder_forward.1} parent=1 // pred_check_branch
      %467 = sbr.rel (0) target = $region65
    $region64: #{decoder_forward.1} parent=1 // pred_region
      %s469 = ssub.s32 64, 64
      %470 = vsyncadd [#allocation13], %s469
      %s471 = sshll.u32 [#allocation12], 4
      %s472 = int_to_ptr.vmem [resolvable:$true] %s471
      %477 = dma.vmem_to_hbm [thread:$0]  %s472, 64, %s10, [#allocation13], 32, 32, 2
    $region65: #{decoder_forward.1} parent=1 // pred_fallthru
      _
    // Predicated region
    $region66: #{decoder_forward.1} parent=1 // pred_check
      _
    $region67: #{decoder_forward.1} parent=1 // pred_check_branch
      %479 = sbr.rel (0) target = $region69
    $region68: #{decoder_forward.1} parent=1 // pred_region
      %s481 = ssub.s32 64, 64
      %482 = vsyncadd [#allocation13], %s481
      %s483 = sshll.u32 [#allocation14], 4
      %s484 = int_to_ptr.vmem [resolvable:$true] %s483
      %489 = dma.vmem_to_hbm [thread:$0]  %s484, 64, %s11, [#allocation13], 32, 32, 2
    $region69: #{decoder_forward.1} parent=1 // pred_fallthru
      _
    // Predicated region
    $region70: #{decoder_forward.1} parent=1 // pred_check
      _
    $region71: #{decoder_forward.1} parent=1 // pred_check_branch
      %491 = sbr.rel (0) target = $region73
    $region72: #{decoder_forward.1} parent=1 // pred_region
      %492 = dma.done [#allocation4], 32
    $region73: #{decoder_forward.1} parent=1 // pred_fallthru
      _
    // Predicated region
    $region74: #{decoder_forward.1} parent=1 // pred_check
      _
    $region75: #{decoder_forward.1} parent=1 // pred_check_branch
      %494 = sbr.rel (0) target = $region77
    $region76: #{decoder_forward.1} parent=1 // pred_region
      %495 = dma.done [#allocation13], 64
    $region77: #{decoder_forward.1} parent=1 // pred_fallthru
      _
    // Predicated region
    $region78: #{decoder_forward.1} parent=1 // pred_check
      _
    $region79: #{decoder_forward.1} parent=1 // pred_check_branch
      %497 = sbr.rel (0) target = $region81
    $region80: #{decoder_forward.1} parent=1 // pred_region
      %498 = dma.done [#allocation13], 64
    $region81: #{decoder_forward.1} parent=1 // pred_fallthru
      _
    %499 = vsyncpa [#allocation3], 1
    %500 = vsyncpa [#allocation6], 1
    %501 = vsyncpa [#allocation9], 1
    %502 = vsyncpa [#allocation4], 1
    %503 = vsyncpa [#allocation13], 1

</llo_original>
